<compile_context>
chip_gen: v7x
topology: tpu7x:2x2x1
jax: 0.10.0
libtpu: 0.0.40
codegen_flags: <defaults>
</compile_context>

<pallas_src>
import jax
import jax.numpy as jnp
from jax import lax
from jax.experimental import pallas as pl
from jax.experimental.pallas import tpu as pltpu


_LANES = 128
_MAX_BLOCK_ROWS = 2048      # 2048 x 128 f32 tile = 1 MiB per input per buffer
_CHUNK_ROWS = 256           # in-kernel accumulation chunk (bounds temp live ranges)
_NUM_SPLITS = 2             # leading "parallel" grid axis (megacore on v7x)
_PAD_LOGIT = -1.0e4         # sigmoid -> 0 and bce(with t=0) -> 0 => zero contribution


def _partial_sums(x, t, row0, rows_valid, need_mask):
    """[sum(p*t), sum(p), sum(t), sum(bce)] of one chunk, each reduced to (8,128)."""
    x = x.astype(jnp.float32)
    t = t.astype(jnp.float32)
    if need_mask:
        # Rows at/after `rows_valid` are garbage from the ragged last block: force
        # them to (PAD_LOGIT, 0) which contributes exactly zero to every sum.
        rid = row0 + lax.broadcasted_iota(jnp.int32, (x.shape[0], 1), 0)
        valid = rid < rows_valid
        x = jnp.where(valid, x, _PAD_LOGIT)
        t = jnp.where(valid, t, 0.0)

    # Stable sigmoid + softplus sharing one exp; approx EUP reciprocal instead of a
    # full f32 divide (the EUP slot has slack; ~1e-4 rel error is fine for a loss).
    e = jnp.exp(-jnp.abs(x))
    inv = pl.reciprocal(1.0 + e, approx=True)
    p = jnp.where(x >= 0.0, 1.0, e) * inv              # sigmoid(x)
    sp = jnp.maximum(x, 0.0) + jnp.log(1.0 + e)        # softplus(x) = -log(1 - p)
    # BCE algebra: -(t*log(p) + (1-t)*log(1-p)) = softplus(x) - t*x.
    # (Drops torch's -100 clamp of the log terms; only deviates for |x| > 100.)
    bce = sp - t * x

    g = x.shape[0] // 8

    def part(v):
        # Lane/sublane-preserving reshape + pure VPU adds; cross-lane reduction is
        # deferred to the wrapper.
        return jnp.sum(v.reshape(g, 8, _LANES), axis=0)

    return part(p * t), part(p), part(t), part(bce)


def _make_kernel(block_rows, chunk_rows, inner, rows_valid, need_mask):
    n_chunks = block_rows // chunk_rows

    def kernel(x_ref, t_ref, acc_ref):
        c = pl.program_id(0)
        k = pl.program_id(1)

        @pl.when(k == 0)
        def _():
            acc_ref[...] = jnp.zeros_like(acc_ref)

        row0 = (c * inner + k) * block_rows  # first global row of this block

        if n_chunks == 1:
            parts = _partial_sums(x_ref[...], t_ref[...], row0, rows_valid, need_mask)
        else:
            def body(i, carry):
                r = pl.multiple_of(i * chunk_rows, 8)
                ps = _partial_sums(x_ref[pl.ds(r, chunk_rows), :],
                                   t_ref[pl.ds(r, chunk_rows), :],
                                   row0 + r, rows_valid, need_mask)
                return tuple(a + b for a, b in zip(carry, ps))

            init = tuple(jnp.zeros((8, _LANES), jnp.float32) for _ in range(4))
            parts = lax.fori_loop(0, n_chunks, body, init, unroll=True)

        acc_ref[0] += parts[0]      # intersection = sum(p * t)
        acc_ref[1] += parts[1]      # sum(p)
        acc_ref[2] += parts[2]      # sum(t)
        acc_ref[3] += parts[3]      # sum(bce)

    return kernel


def dice_bce_loss(inputs, targets, smooth=1.0):
    """Pallas implementation of DiceBCELoss.forward (inputs are raw logits)."""
    n_total = inputs.size
    x = inputs.reshape(-1)
    t = targets.reshape(-1)

    padded = max(pl.cdiv(n_total, _LANES) * _LANES, 8 * _LANES)
    pad = padded - n_total
    if pad:
        # TODO(synk): this jnp.pad copies both inputs; it only triggers when n_total
        # is not a multiple of 128 (or < 1024).  A 1-D manual-DMA path could remove
        # even this residual copy.
        x = jnp.pad(x, (0, pad), constant_values=_PAD_LOGIT)
        t = jnp.pad(t, (0, pad))
    rows = padded // _LANES
    x = x.reshape(rows, _LANES)          # free reshape (no HBM copy)
    t = t.reshape(rows, _LANES)

    # Tile sizing: block_rows never exceeds the array (ragged coverage handled by
    # in-kernel masking), is a multiple of 8, and a multiple of the chunk size.
    if rows <= 512:
        block_rows = (rows // 8) * 8
        chunk_rows = block_rows
    else:
        block_rows = min(_MAX_BLOCK_ROWS, (rows // _CHUNK_ROWS) * _CHUNK_ROWS)
        chunk_rows = _CHUNK_ROWS

    num_blocks = pl.cdiv(rows, block_rows)
    splits = _NUM_SPLITS if num_blocks >= _NUM_SPLITS else 1
    inner = pl.cdiv(num_blocks, splits)
    need_mask = (splits * inner * block_rows != rows)

    if splits * inner == num_blocks:
        def idx(c, k):
            return (c * inner + k, 0)
    else:
        # Overhang block(s) of the last split: clamp to a valid block index; the
        # kernel masks them out entirely (row0 >= rows), so they contribute zero.
        def idx(c, k):
            return (jnp.minimum(c * inner + k, num_blocks - 1), 0)

    in_spec = pl.BlockSpec((block_rows, _LANES), idx)

    partials = pl.pallas_call(
        _make_kernel(block_rows, chunk_rows, inner, rows, need_mask),
        out_shape=jax.ShapeDtypeStruct((splits, 4, 8, _LANES), jnp.float32),
        grid_spec=pltpu.PrefetchScalarGridSpec(
            num_scalar_prefetch=0,
            grid=(splits, inner),
            in_specs=[in_spec, in_spec],
            out_specs=pl.BlockSpec((None, 4, 8, _LANES), lambda c, k: (c, 0, 0, 0)),
        ),
        compiler_params=pltpu.CompilerParams(
            # TODO(synk): on v7x verify via xprof that this axis shards across both
            # TensorCores; if not, switch it to pltpu.CORE_PARALLEL.
            dimension_semantics=("parallel", "arbitrary"),
            vmem_limit_bytes=32 * 1024 * 1024,
        ),
    )(x, t)

    # Tiny final combine (splits * 4 * 8 * 128 floats) done in plain JAX.
    sums = jnp.sum(partials, axis=(0, 2, 3))
    intersection, sum_p, sum_t, sum_bce = sums[0], sums[1], sums[2], sums[3]
    dice_loss = 1.0 - (2.0 * intersection + smooth) / (sum_p + sum_t + smooth)
    bce_mean = sum_bce / jnp.float32(n_total)
    return bce_mean + dice_loss


def _reference_dice_bce(inputs, targets, smooth=1.0):
    """Torch-faithful reference in plain JAX (clamped-log BCE, f32)."""
    p = jax.nn.sigmoid(inputs.astype(jnp.float32)).reshape(-1)
    t = targets.astype(jnp.float32).reshape(-1)
    intersection = jnp.sum(p * t)
    dice = 1.0 - (2.0 * intersection + smooth) / (jnp.sum(p) + jnp.sum(t) + smooth)
    log_p = jnp.maximum(jnp.log(p), -100.0)
    log_1mp = jnp.maximum(jnp.log(1.0 - p), -100.0)
    bce = jnp.mean(-(t * log_p + (1.0 - t) * log_1mp))
    return bce + dice


if __name__ == "__main__":
    key = jax.random.PRNGKey(0)
    k1, k2, k3, k4, k5, k6 = jax.random.split(key, 6)

    # 1) Small NCHW logits + binary masks, 128-aligned (zero-copy, no-mask path).
    B, C, H, W = 2, 4, 16, 16
    x1 = jax.random.normal(k1, (B, C, H, W), dtype=jnp.float32)
    t1 = jax.random.bernoulli(k2, 0.5, (B, C, H, W)).astype(jnp.float32)
    l1 = jax.block_until_ready(dice_bce_loss(x1, t1, smooth=1.0))
    r1 = _reference_dice_bce(x1, t1, smooth=1.0)
    assert jnp.allclose(l1, r1, atol=1e-3, rtol=1e-3), (l1, r1)

    # 2) Non-128-multiple shape: tiny tail pad + in-kernel row masking of the
    #    ragged final block (no block-size alignment padding).
    x2 = 2.5 * jax.random.normal(k3, (2, 3, 37, 53), dtype=jnp.float32)
    t2 = jax.random.bernoulli(k4, 0.3, (2, 3, 37, 53)).astype(jnp.float32)
    l2 = jax.block_until_ready(dice_bce_loss(x2, t2, smooth=1.0))
    r2 = _reference_dice_bce(x2, t2, smooth=1.0)
    assert jnp.allclose(l2, r2, atol=1e-3, rtol=1e-3), (l2, r2)

    # 3) bf16 wire dtypes (halved HBM traffic), two-way split, chunked inner loop
    #    and a masked last block.
    x3 = (1.5 * jax.random.normal(k5, (1, 3, 200, 200), dtype=jnp.float32)
          ).astype(jnp.bfloat16)
    t3 = jax.random.bernoulli(k6, 0.4, (1, 3, 200, 200)).astype(jnp.bfloat16)
    l3 = jax.block_until_ready(dice_bce_loss(x3, t3, smooth=1.0))
    r3 = _reference_dice_bce(x3, t3, smooth=1.0)
    assert jnp.allclose(l3, r3, atol=1e-3, rtol=1e-3), (l3, r3)

    print("KERNEL_OK")
</pallas_src>

<mosaic_0001>
module attributes {stable_mosaic.version = 11 : i64} {
  func.func @kernel(%arg0: i32, %arg1: i32, %arg2: memref<16x128xf32, #tpu.memory_space<vmem>>, %arg3: memref<16x128xf32, #tpu.memory_space<vmem>>, %arg4: memref<1x4x8x128xf32, #tpu.memory_space<vmem>>) attributes {dimension_semantics = [#tpu.dimension_semantics<parallel>, #tpu.dimension_semantics<arbitrary>], iteration_bounds = array<i64: 1, 1>, scalar_prefetch = 0 : i64, scratch_operands = 0 : i64, tpu.core_type = #tpu.core_type<tc>, window_params = [{transform_indices = @transform_0, window_bounds = array<i64: 16, 128>}, {transform_indices = @transform_1, window_bounds = array<i64: 16, 128>}, {transform_indices = @transform_2, window_bounds = array<i64: 1, 4, 8, 128>}]} {
    %c0_i32 = arith.constant 0 : i32
    %0 = arith.cmpi eq, %arg1, %c0_i32 : i32
    %1 = arith.extui %0 : i1 to i32
    %c0_i32_0 = arith.constant 0 : i32
    %2 = arith.cmpi ne, %1, %c0_i32_0 : i32
    scf.if %2 {
      %cst_42 = arith.constant 0.000000e+00 : f32
      %58 = vector.broadcast %cst_42 : f32 to vector<4x8x128xf32>
      %c0_43 = arith.constant 0 : index
      %c0_44 = arith.constant 0 : index
      %c0_45 = arith.constant 0 : index
      %c0_46 = arith.constant 0 : index
      %59 = vector.load %arg4[%c0_43, %c0_44, %c0_45, %c0_46] : memref<1x4x8x128xf32, #tpu.memory_space<vmem>>, vector<1x4x8x128xf32>
      %60 = vector.shape_cast %59 : vector<1x4x8x128xf32> to vector<4x8x128xf32>
      %61 = vector.shape_cast %58 : vector<4x8x128xf32> to vector<1x4x8x128xf32>
      tpu.vector_store %arg4[%c0_43, %c0_44, %c0_45, %c0_46], %61 {strides = array<i32>} : memref<1x4x8x128xf32, #tpu.memory_space<vmem>>, vector<1x4x8x128xf32>,
    } else {
    }
    %c0 = arith.constant 0 : index
    %c0_1 = arith.constant 0 : index
    %3 = vector.load %arg2[%c0, %c0_1] : memref<16x128xf32, #tpu.memory_space<vmem>>, vector<16x128xf32>
    %c0_2 = arith.constant 0 : index
    %c0_3 = arith.constant 0 : index
    %4 = vector.load %arg3[%c0_2, %c0_3] : memref<16x128xf32, #tpu.memory_space<vmem>>, vector<16x128xf32>
    %5 = math.absf %3 : vector<16x128xf32>
    %cst = arith.constant 0.000000e+00 : f32
    %6 = vector.broadcast %cst : f32 to vector<16x128xf32>
    %7 = arith.subf %6, %5 : vector<16x128xf32>
    %8 = math.exp %7 : vector<16x128xf32>
    %cst_4 = arith.constant 1.000000e+00 : f32
    %9 = vector.broadcast %cst_4 : f32 to vector<16x128xf32>
    %10 = arith.addf %9, %8 : vector<16x128xf32>
    %11 = tpu.reciprocal %10 {approx = true} : vector<16x128xf32> -> vector<16x128xf32>
    %cst_5 = arith.constant 0.000000e+00 : f32
    %12 = vector.broadcast %cst_5 : f32 to vector<16x128xf32>
    %13 = arith.cmpf oge, %3, %12 : vector<16x128xf32>
    %cst_6 = arith.constant 1.000000e+00 : f32
    %14 = vector.broadcast %cst_6 : f32 to vector<16x128xf32>
    %15 = arith.select %13, %14, %8 : vector<16x128xi1>, vector<16x128xf32>
    %16 = arith.mulf %15, %11 : vector<16x128xf32>
    %cst_7 = arith.constant 0.000000e+00 : f32
    %17 = vector.broadcast %cst_7 : f32 to vector<16x128xf32>
    %18 = arith.maximumf %3, %17 : vector<16x128xf32>
    %cst_8 = arith.constant 1.000000e+00 : f32
    %19 = vector.broadcast %cst_8 : f32 to vector<16x128xf32>
    %20 = arith.addf %19, %8 : vector<16x128xf32>
    %21 = math.log %20 : vector<16x128xf32>
    %22 = arith.addf %18, %21 : vector<16x128xf32>
    %23 = arith.mulf %4, %3 : vector<16x128xf32>
    %24 = arith.subf %22, %23 : vector<16x128xf32>
    %25 = arith.mulf %16, %4 : vector<16x128xf32>
    %26 = vector.shape_cast %25 : vector<16x128xf32> to vector<2x8x128xf32>
    %cst_9 = arith.constant dense<0.000000e+00> : vector<8x128xf32>
    %27 = vector.multi_reduction <add>, %26, %cst_9 [0] : vector<2x8x128xf32> to vector<8x128xf32>
    %28 = vector.shape_cast %16 : vector<16x128xf32> to vector<2x8x128xf32>
    %cst_10 = arith.constant dense<0.000000e+00> : vector<8x128xf32>
    %29 = vector.multi_reduction <add>, %28, %cst_10 [0] : vector<2x8x128xf32> to vector<8x128xf32>
    %30 = vector.shape_cast %4 : vector<16x128xf32> to vector<2x8x128xf32>
    %cst_11 = arith.constant dense<0.000000e+00> : vector<8x128xf32>
    %31 = vector.multi_reduction <add>, %30, %cst_11 [0] : vector<2x8x128xf32> to vector<8x128xf32>
    %32 = vector.shape_cast %24 : vector<16x128xf32> to vector<2x8x128xf32>
    %cst_12 = arith.constant dense<0.000000e+00> : vector<8x128xf32>
    %33 = vector.multi_reduction <add>, %32, %cst_12 [0] : vector<2x8x128xf32> to vector<8x128xf32>
    %c0_13 = arith.constant 0 : index
    %c0_14 = arith.constant 0 : index
    %c0_15 = arith.constant 0 : index
    %c0_16 = arith.constant 0 : index
    %34 = vector.load %arg4[%c0_13, %c0_14, %c0_15, %c0_16] : memref<1x4x8x128xf32, #tpu.memory_space<vmem>>, vector<1x1x8x128xf32>
    %35 = vector.shape_cast %34 : vector<1x1x8x128xf32> to vector<8x128xf32>
    %36 = arith.addf %35, %27 : vector<8x128xf32>
    %c0_17 = arith.constant 0 : index
    %c0_18 = arith.constant 0 : index
    %c0_19 = arith.constant 0 : index
    %c0_20 = arith.constant 0 : index
    %37 = vector.load %arg4[%c0_17, %c0_18, %c0_19, %c0_20] : memref<1x4x8x128xf32, #tpu.memory_space<vmem>>, vector<1x1x8x128xf32>
    %38 = vector.shape_cast %37 : vector<1x1x8x128xf32> to vector<8x128xf32>
    %39 = vector.shape_cast %36 : vector<8x128xf32> to vector<1x1x8x128xf32>
    tpu.vector_store %arg4[%c0_17, %c0_18, %c0_19, %c0_20], %39 {strides = array<i32>} : memref<1x4x8x128xf32, #tpu.memory_space<vmem>>, vector<1x1x8x128xf32>,
    %c0_21 = arith.constant 0 : index
    %c1 = arith.constant 1 : index
    %c0_22 = arith.constant 0 : index
    %c0_23 = arith.constant 0 : index
    %40 = vector.load %arg4[%c0_21, %c1, %c0_22, %c0_23] : memref<1x4x8x128xf32, #tpu.memory_space<vmem>>, vector<1x1x8x128xf32>
    %41 = vector.shape_cast %40 : vector<1x1x8x128xf32> to vector<8x128xf32>
    %42 = arith.addf %41, %29 : vector<8x128xf32>
    %c0_24 = arith.constant 0 : index
    %c1_25 = arith.constant 1 : index
    %c0_26 = arith.constant 0 : index
    %c0_27 = arith.constant 0 : index
    %43 = vector.load %arg4[%c0_24, %c1_25, %c0_26, %c0_27] : memref<1x4x8x128xf32, #tpu.memory_space<vmem>>, vector<1x1x8x128xf32>
    %44 = vector.shape_cast %43 : vector<1x1x8x128xf32> to vector<8x128xf32>
    %45 = vector.shape_cast %42 : vector<8x128xf32> to vector<1x1x8x128xf32>
    tpu.vector_store %arg4[%c0_24, %c1_25, %c0_26, %c0_27], %45 {strides = array<i32>} : memref<1x4x8x128xf32, #tpu.memory_space<vmem>>, vector<1x1x8x128xf32>,
    %c0_28 = arith.constant 0 : index
    %c2 = arith.constant 2 : index
    %c0_29 = arith.constant 0 : index
    %c0_30 = arith.constant 0 : index
    %46 = vector.load %arg4[%c0_28, %c2, %c0_29, %c0_30] : memref<1x4x8x128xf32, #tpu.memory_space<vmem>>, vector<1x1x8x128xf32>
    %47 = vector.shape_cast %46 : vector<1x1x8x128xf32> to vector<8x128xf32>
    %48 = arith.addf %47, %31 : vector<8x128xf32>
    %c0_31 = arith.constant 0 : index
    %c2_32 = arith.constant 2 : index
    %c0_33 = arith.constant 0 : index
    %c0_34 = arith.constant 0 : index
    %49 = vector.load %arg4[%c0_31, %c2_32, %c0_33, %c0_34] : memref<1x4x8x128xf32, #tpu.memory_space<vmem>>, vector<1x1x8x128xf32>
    %50 = vector.shape_cast %49 : vector<1x1x8x128xf32> to vector<8x128xf32>
    %51 = vector.shape_cast %48 : vector<8x128xf32> to vector<1x1x8x128xf32>
    tpu.vector_store %arg4[%c0_31, %c2_32, %c0_33, %c0_34], %51 {strides = array<i32>} : memref<1x4x8x128xf32, #tpu.memory_space<vmem>>, vector<1x1x8x128xf32>,
    %c0_35 = arith.constant 0 : index
    %c3 = arith.constant 3 : index
    %c0_36 = arith.constant 0 : index
    %c0_37 = arith.constant 0 : index
    %52 = vector.load %arg4[%c0_35, %c3, %c0_36, %c0_37] : memref<1x4x8x128xf32, #tpu.memory_space<vmem>>, vector<1x1x8x128xf32>
    %53 = vector.shape_cast %52 : vector<1x1x8x128xf32> to vector<8x128xf32>
    %54 = arith.addf %53, %33 : vector<8x128xf32>
    %c0_38 = arith.constant 0 : index
    %c3_39 = arith.constant 3 : index
    %c0_40 = arith.constant 0 : index
    %c0_41 = arith.constant 0 : index
    %55 = vector.load %arg4[%c0_38, %c3_39, %c0_40, %c0_41] : memref<1x4x8x128xf32, #tpu.memory_space<vmem>>, vector<1x1x8x128xf32>
    %56 = vector.shape_cast %55 : vector<1x1x8x128xf32> to vector<8x128xf32>
    %57 = vector.shape_cast %54 : vector<8x128xf32> to vector<1x1x8x128xf32>
    tpu.vector_store %arg4[%c0_38, %c3_39, %c0_40, %c0_41], %57 {strides = array<i32>} : memref<1x4x8x128xf32, #tpu.memory_space<vmem>>, vector<1x1x8x128xf32>,
    return
  }
  func.func @transform_0(%arg0: i32, %arg1: i32) -> (i32, i32) {
    %c1_i32 = arith.constant 1 : i32
    %0 = arith.muli %arg0, %c1_i32 : i32
    %1 = arith.addi %0, %arg1 : i32
    %c0_i32 = arith.constant 0 : i32
    %c0_i32_0 = arith.constant 0 : i32
    return %1, %c0_i32 : i32, i32
  }
  func.func @transform_1(%arg0: i32, %arg1: i32) -> (i32, i32) {
    %c1_i32 = arith.constant 1 : i32
    %0 = arith.muli %arg0, %c1_i32 : i32
    %1 = arith.addi %0, %arg1 : i32
    %c0_i32 = arith.constant 0 : i32
    %c0_i32_0 = arith.constant 0 : i32
    return %1, %c0_i32 : i32, i32
  }
  func.func @transform_2(%arg0: i32, %arg1: i32) -> (i32, i32, i32, i32) {
    %c0_i32 = arith.constant 0 : i32
    %c0_i32_0 = arith.constant 0 : i32
    %c0_i32_1 = arith.constant 0 : i32
    %c0_i32_2 = arith.constant 0 : i32
    return %arg0, %c0_i32, %c0_i32_0, %c0_i32_1 : i32, i32, i32, i32
  }
}

</mosaic_0001>

<llo_original>
// kernel: tpu_custom_call.1
$region0: #{tpu_custom_call.1}
  #allocation0 [shape = 'u32[]', space=smem, size = 0x4, offset = 0x4, fixed_abs, tag = 'smem constant byte address 0x4 - core index']
  #allocation1 [shape = 'u32[144,128]{1,0:T(1,128)}', space=vmem, size = 0x12000, scoped, tag = 'internal scratch']
  %s0 = inlined_call_operand.hbm [shape: f32[16,128], index: 0, kind: input, shape index: {}]
  %s1 = inlined_call_operand.hbm [shape: f32[16,128], index: 1, kind: input, shape index: {}]
  %s2 = inlined_call_operand.hbm [shape: f32[1,4,8,128], index: 2, kind: output, shape index: {}]
  %s3 = sld [smem:[#allocation0]]
  $region30: #{tpu_custom_call.1} parent=0
    _
  %s5 = ssub.s32 1, %s3
  %s6 = scalar_select 0, %s5, %s3
  $region1: #{tpu_custom_call.1} parent=0
    #allocation2 [shape = 'u8[8192]{0}', space=vmem, size = 0x2000, scoped, tag = 'input window, operand 0, single buffered']
    #allocation3 [shape = 's32[1]{0}', space=sflag, size = 0x4, scoped, tag = 'scoped memory for tpu_custom_call.1']
    #allocation4 [shape = 's32[1]{0}', space=sflag, size = 0x4, scoped, tag = 'scoped memory for tpu_custom_call.1']
    #allocation5 [shape = 'u8[8192]{0}', space=vmem, size = 0x2000, scoped, tag = 'input window, operand 1, single buffered']
    #allocation6 [shape = 's32[1]{0}', space=sflag, size = 0x4, scoped, tag = 'scoped memory for tpu_custom_call.1']
    #allocation7 [shape = 'u8[16384]{0}', space=vmem, size = 0x4000, scoped, tag = 'output window, operand 0, single buffered']
    %7 = vsyncpa [#allocation3], 0
    %8 = vsyncpa [#allocation6], 0
    %9 = vsyncpa [#allocation4], 0
    // Predicated region
    $region2: #{tpu_custom_call.1} parent=1 // pred_check
      _
    $region3: #{tpu_custom_call.1} parent=1 // pred_check_branch
      %11 = sbr.rel (0) target = $region5
    $region4: #{tpu_custom_call.1} parent=1 // pred_region
      %s12 = sadd.s32 0, 0
      %s13 = smul.u32 2, %s12
      %s15 = ssub.s32 256, 256
      %16 = vsyncadd [#allocation3], %s15
      %s17 = smul.addr %s13, 128
      %s18 = scalar_lea.hbm %s0, %s17
      %s19 = sshll.u32 [#allocation2], 4
      %s20 = int_to_ptr.vmem [resolvable:$true] %s19
      %25 = dma.hbm_to_vmem [thread:$0]  %s18, 256, %s20, [#allocation3], 128, 128, 8
    $region5: #{tpu_custom_call.1} parent=1 // pred_fallthru
      _
    // Predicated region
    $region6: #{tpu_custom_call.1} parent=1 // pred_check
      _
    $region7: #{tpu_custom_call.1} parent=1 // pred_check_branch
      %27 = sbr.rel (0) target = $region9
    $region8: #{tpu_custom_call.1} parent=1 // pred_region
      %s28 = sadd.s32 0, 0
      %s29 = smul.u32 2, %s28
      %s31 = ssub.s32 256, 256
      %32 = vsyncadd [#allocation6], %s31
      %s33 = smul.addr %s29, 128
      %s34 = scalar_lea.hbm %s1, %s33
      %s35 = sshll.u32 [#allocation5], 4
      %s36 = int_to_ptr.vmem [resolvable:$true] %s35
      %41 = dma.hbm_to_vmem [thread:$0]  %s34, 256, %s36, [#allocation6], 128, 128, 8
    $region9: #{tpu_custom_call.1} parent=1 // pred_fallthru
      _
    // Predicated region
    $region10: #{tpu_custom_call.1} parent=1 // pred_check
      _
    $region11: #{tpu_custom_call.1} parent=1 // pred_check_branch
      %43 = sbr.rel (0) target = $region13
    $region12: #{tpu_custom_call.1} parent=1 // pred_region
      %44 = dma.done [#allocation3], 256
    $region13: #{tpu_custom_call.1} parent=1 // pred_fallthru
      _
    // Predicated region
    $region14: #{tpu_custom_call.1} parent=1 // pred_check
      _
    $region15: #{tpu_custom_call.1} parent=1 // pred_check_branch
      %46 = sbr.rel (0) target = $region17
    $region16: #{tpu_custom_call.1} parent=1 // pred_region
      %47 = dma.done [#allocation6], 256
    $region17: #{tpu_custom_call.1} parent=1 // pred_fallthru
      _
    %s48 = sadd.s32 0, 0
    %s49 = smul.u32 2, %s48
    %s50 = sadd.s32 0, 0
    %s51 = smul.u32 2, %s50
    %p52 = scmp.eq.s32.totalorder 0, 0
    // Predicated region
    $region18: #{tpu_custom_call.1} parent=1 // pred_check
      %p53 = pneg %p52
    $region19: #{tpu_custom_call.1} parent=1 // pred_check_branch
      %55 = sbr.rel (%p53) target = $region21
    $region20: #{tpu_custom_call.1} parent=1 // pred_region
      %56 = vst [vmem:[#allocation7] sm:$0xff] 0.0
      %57 = vst [vmem:[#allocation7 + $0x8] sm:$0xff] 0.0
      %58 = vst [vmem:[#allocation7 + $0x10] sm:$0xff] 0.0
      %59 = vst [vmem:[#allocation7 + $0x18] sm:$0xff] 0.0
    $region21: #{tpu_custom_call.1} parent=1 // pred_fallthru
      _
    %v60 = vld [vmem:[#allocation2] sm:$0xff]
    %v61 = vld [vmem:[#allocation2 + $0x8] sm:$0xff]
    %v62 = vld [vmem:[#allocation5] sm:$0xff]
    %v63 = vld [vmem:[#allocation5 + $0x8] sm:$0xff]
    %v64 = vand.u32 2147483647, %v60
    %v65 = vand.u32 2147483647, %v61
    %v66 = vsub.f32 0.0, %v64
    %v67 = vsub.f32 0.0, %v65
    %v68 = vmul.f32 %v66, 1.442695
    %v69 = vpow.pop %v68
    %v70 = vmul.f32 %v67, 1.442695
    %v71 = vpow.pop %v70
    %v72 = vadd.f32 %v69, 1.0
    %v73 = vadd.f32 %v71, 1.0
    %v74 = vrcp.pop %v72
    %v75 = vrcp.pop %v73
    %vm76 = vcmp.ge.f32.partialorder %v60, 0.0
    %vm77 = vcmp.ge.f32.partialorder %v61, 0.0
    %v78 = vsel %vm76, 1.0, %v69
    %v79 = vsel %vm77, 1.0, %v71
    %v80 = vmul.f32 %v78, %v74
    %v81 = vmul.f32 %v79, %v75
    %v82 = vmax.f32 %v60, 0.0
    %v83 = vmax.f32 %v61, 0.0
    %v84 = vlog2.pop %v72
    %v85 = vmul.f32 %v84, 0.6931472
    %v86 = vlog2.pop %v73
    %v87 = vmul.f32 %v86, 0.6931472
    %v88 = vadd.f32 %v82, %v85
    %v89 = vadd.f32 %v83, %v87
    %v90 = vmul.f32 %v62, %v60
    %v91 = vmul.f32 %v63, %v61
    %v92 = vsub.f32 %v88, %v90
    %v93 = vsub.f32 %v89, %v91
    %v94 = vmul.f32 %v80, %v62
    %v95 = vmul.f32 %v81, %v63
    %v96 = vadd.f32 %v94, %v95
    %v97 = vadd.f32 %v80, %v81
    %v98 = vadd.f32 %v62, %v63
    %v99 = vadd.f32 %v92, %v93
    %v100 = vld [vmem:[#allocation7] sm:$0xff]
    %v101 = vadd.f32 %v100, %v96
    %102 = vst [vmem:[#allocation7] sm:$0xff] %v101
    %s103 = scalar_lea.vmem [#allocation7], 8
    %v104 = vld [vmem:[%s103] sm:$0xff]
    %v105 = vadd.f32 %v104, %v97
    %106 = vst [vmem:[%s103] sm:$0xff] %v105
    %s107 = scalar_lea.vmem [#allocation7], 16
    %v108 = vld [vmem:[%s107] sm:$0xff]
    %v109 = vadd.f32 %v108, %v98
    %110 = vst [vmem:[%s107] sm:$0xff] %v109
    %s111 = scalar_lea.vmem [#allocation7], 24
    %v112 = vld [vmem:[%s111] sm:$0xff]
    %v113 = vadd.f32 %v112, %v99
    %114 = vst [vmem:[%s111] sm:$0xff] %v113
    // Predicated region
    $region22: #{tpu_custom_call.1} parent=1 // pred_check
      _
    $region23: #{tpu_custom_call.1} parent=1 // pred_check_branch
      %116 = sbr.rel (0) target = $region25
    $region24: #{tpu_custom_call.1} parent=1 // pred_region
      %s118 = ssub.s32 512, 512
      %119 = vsyncadd [#allocation4], %s118
      %s120 = sshll.u32 [#allocation7], 4
      %s121 = int_to_ptr.vmem [resolvable:$true] %s120
      %126 = dma.vmem_to_hbm [thread:$0]  %s121, 512, %s2, [#allocation4], 128, 128, 8
    $region25: #{tpu_custom_call.1} parent=1 // pred_fallthru
      _
    // Predicated region
    $region26: #{tpu_custom_call.1} parent=1 // pred_check
      _
    $region27: #{tpu_custom_call.1} parent=1 // pred_check_branch
      %128 = sbr.rel (0) target = $region29
    $region28: #{tpu_custom_call.1} parent=1 // pred_region
      %129 = dma.done [#allocation4], 512
    $region29: #{tpu_custom_call.1} parent=1 // pred_fallthru
      _
    %130 = vsyncpa [#allocation3], 1
    %131 = vsyncpa [#allocation6], 1
    %132 = vsyncpa [#allocation4], 1

</llo_original>
